<compile_context>
chip_gen: v7x
topology: tpu7x:2x2x1
jax: 0.10.0
libtpu: 0.0.40
codegen_flags: <defaults>
</compile_context>

<pallas_src>
import math

import jax
import jax.numpy as jnp
from jax.experimental import pallas as pl
from jax.experimental.pallas import tpu as pltpu

_U_EPS = 1e-7  # clamp for u so log(-log(u)) stays finite


def _round_up(x, m):
    return ((x + m - 1) // m) * m


def _cdiv(a, b):
    return -(-a // b)


def actor_kernel(obs_ref, w1_ref, b1_ref, w2_ref, b2_ref, w3_ref, b3_ref,
                 u_ref, policy_ref):
    x = obs_ref[...]

    # linear_a1 + LeakyReLU(0.01)
    h1 = jnp.dot(x, w1_ref[...], preferred_element_type=jnp.float32) + b1_ref[...]
    h1 = jnp.where(h1 > 0, h1, 0.01 * h1)

    # linear_a2 + LeakyReLU(0.01)
    h2 = jnp.dot(h1, w2_ref[...], preferred_element_type=jnp.float32) + b2_ref[...]
    h2 = jnp.where(h2 > 0, h2, 0.01 * h2)

    # linear_a (model_out)
    logits = jnp.dot(h2, w3_ref[...], preferred_element_type=jnp.float32) + b3_ref[...]

    # Gumbel noise fused in-kernel: g = -log(-log(u)); u clamped away from {0,1}.
    u = jnp.clip(u_ref[...], _U_EPS, 1.0 - _U_EPS)
    z = logits - jnp.log(-jnp.log(u))

    # numerically-stable softmax with EXACT normalization (rows sum to 1).
    z = z - jnp.max(z, axis=-1, keepdims=True)
    e = jnp.exp(z)
    policy_ref[...] = e / jnp.sum(e, axis=-1, keepdims=True)


def _choose_tiles(batch, block_batch):
    """Balanced batch tiles; >=2 grid steps when there is enough work (v7x megacore)."""
    nb = max(_cdiv(batch, block_batch), 2 if batch >= 16 else 1)
    tb = _round_up(_cdiv(batch, nb), 8)
    return nb, tb, nb * tb


def actor_forward(obs, params, u=None, *, key=None, block_batch=2048):
    """obs: (B, num_inputs) f32.  u: optional (B, action_size) uniform(0,1) f32.

    If `u` is None, the Gumbel noise uniforms are drawn from `key` (defaults to
    PRNGKey(0)), matching the module's internal th.rand_like behaviour.
    Returns policy of shape (B, action_size).
    """
    w1, b1, w2, b2, w3, b3 = params
    batch, num_inputs = obs.shape
    action_size = w3.shape[1]

    if u is None:
        if key is None:
            key = jax.random.PRNGKey(0)
        u = jax.random.uniform(key, (batch, action_size), jnp.float32)

    nb, tb, padded_batch = _choose_tiles(batch, block_batch)
    if padded_batch != batch:
        obs = jnp.pad(obs, ((0, padded_batch - batch), (0, 0)))
        u = jnp.pad(u, ((0, padded_batch - batch), (0, 0)), constant_values=0.5)

    tile = lambda cols: pl.BlockSpec((tb, cols), lambda i: (i, 0))       # batch-tiled
    resident = lambda shape: pl.BlockSpec(shape, lambda i: (0, 0))       # VMEM-resident

    policy = pl.pallas_call(
        actor_kernel,
        out_shape=jax.ShapeDtypeStruct((padded_batch, action_size), jnp.float32),
        grid=(nb,),
        in_specs=[
            tile(num_inputs),
            resident(w1.shape), resident(b1.shape),
            resident(w2.shape), resident(b2.shape),
            resident(w3.shape), resident(b3.shape),
            tile(action_size),
        ],
        out_specs=tile(action_size),
        compiler_params=pltpu.CompilerParams(
            dimension_semantics=("parallel",)),
    )(obs, w1, b1, w2, b2, w3, b3, u)

    if padded_batch != batch:
        policy = policy[:batch]
    return policy


def actor_reference(obs, params, u):
    """Pure-JAX reference of the same forward pass (for correctness check)."""
    w1, b1, w2, b2, w3, b3 = params
    lrelu = lambda x: jnp.where(x > 0, x, 0.01 * x)
    h1 = lrelu(obs @ w1 + b1)
    h2 = lrelu(h1 @ w2 + b2)
    logits = h2 @ w3 + b3
    uc = jnp.clip(u, _U_EPS, 1.0 - _U_EPS)
    z = logits - jnp.log(-jnp.log(uc))
    z = z - jnp.max(z, axis=-1, keepdims=True)
    e = jnp.exp(z)
    return e / jnp.sum(e, axis=-1, keepdims=True)


def xavier_uniform(key, fan_in, fan_out, gain):
    # matches torch.nn.init.xavier_uniform_ (weight stored transposed: (in, out))
    a = gain * math.sqrt(6.0 / (fan_in + fan_out))
    return jax.random.uniform(key, (fan_in, fan_out), jnp.float32, -a, a)


def init_actor_params(key, num_inputs, action_size):
    gain = math.sqrt(2.0 / (1.0 + 0.01 ** 2))  # calculate_gain('leaky_relu')
    k1, k2, k3, kb1, kb2, kb3 = jax.random.split(key, 6)

    w1 = xavier_uniform(k1, num_inputs, 64, gain)
    w2 = xavier_uniform(k2, 64, 64, gain)
    w3 = xavier_uniform(k3, 64, action_size, gain)

    # nn.Linear default bias init: U(-1/sqrt(fan_in), 1/sqrt(fan_in)); kept as (1, out)
    def bias(k, fan_in, out):
        bnd = 1.0 / math.sqrt(fan_in)
        return jax.random.uniform(k, (1, out), jnp.float32, -bnd, bnd)

    b1 = bias(kb1, num_inputs, 64)
    b2 = bias(kb2, 64, 64)
    b3 = bias(kb3, 64, action_size)
    return (w1, b1, w2, b2, w3, b3)


if __name__ == "__main__":
    num_inputs = 16
    action_size = 8

    key = jax.random.PRNGKey(0)
    kp, ko1, ku1, ko2, ku2, kn = jax.random.split(key, 6)
    params = init_actor_params(kp, num_inputs, action_size)

    # --- test 1: single-tile batch, explicit u, compare against pure-JAX ref ---
    batch = 8
    obs = jax.random.normal(ko1, (batch, num_inputs), jnp.float32)
    u = jax.random.uniform(ku1, (batch, action_size), jnp.float32)

    policy = jax.block_until_ready(actor_forward(obs, params, u))
    ref = actor_reference(obs, params, u)
    assert policy.shape == (batch, action_size)
    assert jnp.allclose(policy, ref, atol=1e-4, rtol=1e-4)
    assert jnp.allclose(jnp.sum(policy, axis=-1), 1.0, atol=1e-4)
    assert bool(jnp.all(policy >= 0.0))

    # --- test 2: multi-step grid with batch padding (exercises tiling logic) ---
    batch2 = 20  # -> nb=2, tb=16, padded_batch=32
    obs2 = jax.random.normal(ko2, (batch2, num_inputs), jnp.float32)
    u2 = jax.random.uniform(ku2, (batch2, action_size), jnp.float32)

    policy2 = jax.block_until_ready(actor_forward(obs2, params, u2))
    ref2 = actor_reference(obs2, params, u2)
    assert policy2.shape == (batch2, action_size)
    assert jnp.allclose(policy2, ref2, atol=1e-4, rtol=1e-4)
    assert jnp.allclose(jnp.sum(policy2, axis=-1), 1.0, atol=1e-4)

    # --- test 3: module-style call (noise drawn internally from a key) ---
    policy3 = jax.block_until_ready(actor_forward(obs, params, key=kn))
    assert policy3.shape == (batch, action_size)
    assert jnp.allclose(jnp.sum(policy3, axis=-1), 1.0, atol=1e-4)

    print("KERNEL_OK")
</pallas_src>

<mosaic_0001>
module attributes {stable_mosaic.version = 11 : i64} {
  func.func @actor_kernel(%arg0: i32, %arg1: memref<8x16xf32, #tpu.memory_space<vmem>>, %arg2: memref<16x64xf32, #tpu.memory_space<vmem>>, %arg3: memref<1x64xf32, #tpu.memory_space<vmem>>, %arg4: memref<64x64xf32, #tpu.memory_space<vmem>>, %arg5: memref<1x64xf32, #tpu.memory_space<vmem>>, %arg6: memref<64x8xf32, #tpu.memory_space<vmem>>, %arg7: memref<1x8xf32, #tpu.memory_space<vmem>>, %arg8: memref<8x8xf32, #tpu.memory_space<vmem>>, %arg9: memref<8x8xf32, #tpu.memory_space<vmem>>) attributes {dimension_semantics = [#tpu.dimension_semantics<parallel>], iteration_bounds = array<i64: 1>, scalar_prefetch = 0 : i64, scratch_operands = 0 : i64, tpu.core_type = #tpu.core_type<tc>, window_params = [{transform_indices = @transform_0, window_bounds = array<i64: 8, 16>}, {pipeline_mode = #tpu.pipeline_mode<synchronous>, transform_indices = @transform_1, window_bounds = array<i64: 16, 64>}, {pipeline_mode = #tpu.pipeline_mode<synchronous>, transform_indices = @transform_2, window_bounds = array<i64: 1, 64>}, {pipeline_mode = #tpu.pipeline_mode<synchronous>, transform_indices = @transform_3, window_bounds = array<i64: 64, 64>}, {pipeline_mode = #tpu.pipeline_mode<synchronous>, transform_indices = @transform_4, window_bounds = array<i64: 1, 64>}, {pipeline_mode = #tpu.pipeline_mode<synchronous>, transform_indices = @transform_5, window_bounds = array<i64: 64, 8>}, {pipeline_mode = #tpu.pipeline_mode<synchronous>, transform_indices = @transform_6, window_bounds = array<i64: 1, 8>}, {transform_indices = @transform_7, window_bounds = array<i64: 8, 8>}, {transform_indices = @transform_8, window_bounds = array<i64: 8, 8>}]} {
    %c0 = arith.constant 0 : index
    %c0_0 = arith.constant 0 : index
    %0 = vector.load %arg1[%c0, %c0_0] : memref<8x16xf32, #tpu.memory_space<vmem>>, vector<8x16xf32>
    %c0_1 = arith.constant 0 : index
    %c0_2 = arith.constant 0 : index
    %1 = vector.load %arg2[%c0_1, %c0_2] : memref<16x64xf32, #tpu.memory_space<vmem>>, vector<16x64xf32>
    %cst = arith.constant dense<0.000000e+00> : vector<8x64xf32>
    %2 = tpu.matmul %0, %1, %cst {dimension_numbers = #tpu.dot_dimension_numbers<[1], [0], [0], [1], [0, 0, 1, 1], [], []>} : vector<8x16xf32>, vector<16x64xf32>, vector<8x64xf32> -> vector<8x64xf32>
    %c0_3 = arith.constant 0 : index
    %c0_4 = arith.constant 0 : index
    %3 = vector.load %arg3[%c0_3, %c0_4] : memref<1x64xf32, #tpu.memory_space<vmem>>, vector<1x64xf32>
    %4 = vector.broadcast %3 : vector<1x64xf32> to vector<8x64xf32>
    %5 = arith.addf %2, %4 : vector<8x64xf32>
    %cst_5 = arith.constant 0.000000e+00 : f32
    %6 = vector.broadcast %cst_5 : f32 to vector<8x64xf32>
    %7 = arith.cmpf ogt, %5, %6 : vector<8x64xf32>
    %cst_6 = arith.constant 0.00999999977 : f32
    %8 = vector.broadcast %cst_6 : f32 to vector<8x64xf32>
    %9 = arith.mulf %8, %5 : vector<8x64xf32>
    %10 = arith.select %7, %5, %9 : vector<8x64xi1>, vector<8x64xf32>
    %c0_7 = arith.constant 0 : index
    %c0_8 = arith.constant 0 : index
    %11 = vector.load %arg4[%c0_7, %c0_8] : memref<64x64xf32, #tpu.memory_space<vmem>>, vector<64x64xf32>
    %cst_9 = arith.constant dense<0.000000e+00> : vector<8x64xf32>
    %12 = tpu.matmul %10, %11, %cst_9 {dimension_numbers = #tpu.dot_dimension_numbers<[1], [0], [0], [1], [0, 0, 1, 1], [], []>} : vector<8x64xf32>, vector<64x64xf32>, vector<8x64xf32> -> vector<8x64xf32>
    %c0_10 = arith.constant 0 : index
    %c0_11 = arith.constant 0 : index
    %13 = vector.load %arg5[%c0_10, %c0_11] : memref<1x64xf32, #tpu.memory_space<vmem>>, vector<1x64xf32>
    %14 = vector.broadcast %13 : vector<1x64xf32> to vector<8x64xf32>
    %15 = arith.addf %12, %14 : vector<8x64xf32>
    %cst_12 = arith.constant 0.000000e+00 : f32
    %16 = vector.broadcast %cst_12 : f32 to vector<8x64xf32>
    %17 = arith.cmpf ogt, %15, %16 : vector<8x64xf32>
    %cst_13 = arith.constant 0.00999999977 : f32
    %18 = vector.broadcast %cst_13 : f32 to vector<8x64xf32>
    %19 = arith.mulf %18, %15 : vector<8x64xf32>
    %20 = arith.select %17, %15, %19 : vector<8x64xi1>, vector<8x64xf32>
    %c0_14 = arith.constant 0 : index
    %c0_15 = arith.constant 0 : index
    %21 = vector.load %arg6[%c0_14, %c0_15] : memref<64x8xf32, #tpu.memory_space<vmem>>, vector<64x8xf32>
    %cst_16 = arith.constant dense<0.000000e+00> : vector<8x8xf32>
    %22 = tpu.matmul %20, %21, %cst_16 {dimension_numbers = #tpu.dot_dimension_numbers<[1], [0], [0], [1], [0, 0, 1, 1], [], []>} : vector<8x64xf32>, vector<64x8xf32>, vector<8x8xf32> -> vector<8x8xf32>
    %c0_17 = arith.constant 0 : index
    %c0_18 = arith.constant 0 : index
    %23 = vector.load %arg7[%c0_17, %c0_18] : memref<1x8xf32, #tpu.memory_space<vmem>>, vector<1x8xf32>
    %24 = vector.broadcast %23 : vector<1x8xf32> to vector<8x8xf32>
    %25 = arith.addf %22, %24 : vector<8x8xf32>
    %c0_19 = arith.constant 0 : index
    %c0_20 = arith.constant 0 : index
    %26 = vector.load %arg8[%c0_19, %c0_20] : memref<8x8xf32, #tpu.memory_space<vmem>>, vector<8x8xf32>
    %cst_21 = arith.constant 1.000000e-07 : f32
    %cst_22 = arith.constant 0.99999988 : f32
    %27 = vector.broadcast %cst_21 : f32 to vector<8x8xf32>
    %28 = arith.maximumf %27, %26 : vector<8x8xf32>
    %29 = vector.broadcast %cst_22 : f32 to vector<8x8xf32>
    %30 = arith.minimumf %29, %28 : vector<8x8xf32>
    %31 = math.log %30 : vector<8x8xf32>
    %cst_23 = arith.constant 0.000000e+00 : f32
    %32 = vector.broadcast %cst_23 : f32 to vector<8x8xf32>
    %33 = arith.subf %32, %31 : vector<8x8xf32>
    %34 = math.log %33 : vector<8x8xf32>
    %35 = arith.subf %25, %34 : vector<8x8xf32>
    %cst_24 = arith.constant dense<0xFF800000> : vector<8xf32>
    %36 = vector.multi_reduction <maximumf>, %35, %cst_24 [1] : vector<8x8xf32> to vector<8xf32>
    %37 = vector.shape_cast %36 : vector<8xf32> to vector<8x1xf32>
    %38 = vector.broadcast %37 : vector<8x1xf32> to vector<8x8xf32>
    %39 = arith.subf %35, %38 : vector<8x8xf32>
    %40 = math.exp %39 : vector<8x8xf32>
    %cst_25 = arith.constant dense<0.000000e+00> : vector<8xf32>
    %41 = vector.multi_reduction <add>, %40, %cst_25 [1] : vector<8x8xf32> to vector<8xf32>
    %42 = vector.shape_cast %41 : vector<8xf32> to vector<8x1xf32>
    %43 = vector.broadcast %42 : vector<8x1xf32> to vector<8x8xf32>
    %44 = arith.divf %40, %43 : vector<8x8xf32>
    %c0_26 = arith.constant 0 : index
    %c0_27 = arith.constant 0 : index
    %45 = vector.load %arg9[%c0_26, %c0_27] : memref<8x8xf32, #tpu.memory_space<vmem>>, vector<8x8xf32>
    tpu.vector_store %arg9[%c0_26, %c0_27], %44 {strides = array<i32>} : memref<8x8xf32, #tpu.memory_space<vmem>>, vector<8x8xf32>,
    return
  }
  func.func @transform_0(%arg0: i32) -> (i32, i32) {
    %c0_i32 = arith.constant 0 : i32
    %c0_i32_0 = arith.constant 0 : i32
    return %arg0, %c0_i32 : i32, i32
  }
  func.func @transform_1(%arg0: i32) -> (i32, i32) {
    %c0_i32 = arith.constant 0 : i32
    %c0_i32_0 = arith.constant 0 : i32
    %c0_i32_1 = arith.constant 0 : i32
    return %c0_i32, %c0_i32_0 : i32, i32
  }
  func.func @transform_2(%arg0: i32) -> (i32, i32) {
    %c0_i32 = arith.constant 0 : i32
    %c0_i32_0 = arith.constant 0 : i32
    %c0_i32_1 = arith.constant 0 : i32
    return %c0_i32, %c0_i32_0 : i32, i32
  }
  func.func @transform_3(%arg0: i32) -> (i32, i32) {
    %c0_i32 = arith.constant 0 : i32
    %c0_i32_0 = arith.constant 0 : i32
    %c0_i32_1 = arith.constant 0 : i32
    return %c0_i32, %c0_i32_0 : i32, i32
  }
  func.func @transform_4(%arg0: i32) -> (i32, i32) {
    %c0_i32 = arith.constant 0 : i32
    %c0_i32_0 = arith.constant 0 : i32
    %c0_i32_1 = arith.constant 0 : i32
    return %c0_i32, %c0_i32_0 : i32, i32
  }
  func.func @transform_5(%arg0: i32) -> (i32, i32) {
    %c0_i32 = arith.constant 0 : i32
    %c0_i32_0 = arith.constant 0 : i32
    %c0_i32_1 = arith.constant 0 : i32
    return %c0_i32, %c0_i32_0 : i32, i32
  }
  func.func @transform_6(%arg0: i32) -> (i32, i32) {
    %c0_i32 = arith.constant 0 : i32
    %c0_i32_0 = arith.constant 0 : i32
    %c0_i32_1 = arith.constant 0 : i32
    return %c0_i32, %c0_i32_0 : i32, i32
  }
  func.func @transform_7(%arg0: i32) -> (i32, i32) {
    %c0_i32 = arith.constant 0 : i32
    %c0_i32_0 = arith.constant 0 : i32
    return %arg0, %c0_i32 : i32, i32
  }
  func.func @transform_8(%arg0: i32) -> (i32, i32) {
    %c0_i32 = arith.constant 0 : i32
    %c0_i32_0 = arith.constant 0 : i32
    return %arg0, %c0_i32 : i32, i32
  }
}

</mosaic_0001>

<llo_original>
// kernel: tpu_custom_call.1
$region0: #{tpu_custom_call.1}
  #allocation0 [shape = 'u32[]', space=smem, size = 0x4, offset = 0x4, fixed_abs, tag = 'smem constant byte address 0x4 - core index']
  #allocation1 [shape = 'u32[144,128]{1,0:T(1,128)}', space=vmem, size = 0x12000, scoped, tag = 'internal scratch']
  %s0 = inlined_call_operand.hbm [shape: f32[8,16], index: 0, kind: input, shape index: {}]
  %s1 = inlined_call_operand.vmem [shape: f32[16,64], index: 1, kind: input, shape index: {}]
  %s2 = inlined_call_operand.vmem [shape: f32[1,64], index: 2, kind: input, shape index: {}]
  %s3 = inlined_call_operand.vmem [shape: f32[64,64], index: 3, kind: input, shape index: {}]
  %s4 = inlined_call_operand.vmem [shape: f32[1,64], index: 4, kind: input, shape index: {}]
  %s5 = inlined_call_operand.vmem [shape: f32[64,8], index: 5, kind: input, shape index: {}]
  %s6 = inlined_call_operand.hbm [shape: f32[1,8], index: 6, kind: input, shape index: {}]
  %s7 = inlined_call_operand.vmem [shape: f32[8,8], index: 7, kind: input, shape index: {}]
  %s8 = inlined_call_operand.hbm [shape: f32[8,8], index: 8, kind: output, shape index: {}]
  %s9 = sld [smem:[#allocation0]]
  $region50: #{tpu_custom_call.1} parent=0
    _
  %s11 = ssub.s32 1, %s9
  %s12 = scalar_select 0, %s11, %s9
  $region1: #{tpu_custom_call.1} parent=0
    #allocation2 [shape = 'u8[4096]{0}', space=vmem, size = 0x1000, scoped, tag = 'input window, operand 0, single buffered']
    #allocation3 [shape = 's32[1]{0}', space=sflag, size = 0x4, scoped, tag = 'scoped memory for tpu_custom_call.1']
    #allocation4 [shape = 's32[1]{0}', space=sflag, size = 0x4, scoped, tag = 'scoped memory for tpu_custom_call.1']
    #allocation5 [shape = 'u8[512]{0}', space=vmem, size = 0x400, scoped, tag = 'input window, operand 6, single buffered']
    #allocation6 [shape = 's32[1]{0}', space=sflag, size = 0x4, scoped, tag = 'scoped memory for tpu_custom_call.1']
    #allocation7 [shape = 'u8[4096]{0}', space=vmem, size = 0x1000, scoped, tag = 'output window, operand 0, single buffered']
    %13 = vsyncpa [#allocation3], 0
    %14 = vsyncpa [#allocation6], 0
    %15 = vsyncpa [#allocation4], 0
    // Predicated region
    $region2: #{tpu_custom_call.1} parent=1 // pred_check
      _
    $region3: #{tpu_custom_call.1} parent=1 // pred_check_branch
      %17 = sbr.rel (0) target = $region5
    $region4: #{tpu_custom_call.1} parent=1 // pred_region
      %s19 = ssub.s32 128, 128
      %20 = vsyncadd [#allocation3], %s19
      %s22 = sshll.u32 [#allocation2], 4
      %s23 = int_to_ptr.vmem [resolvable:$true] %s22
      %25 = dma.hbm_to_vmem [thread:$0]  %s0, 128, %s23, [#allocation3]
    $region5: #{tpu_custom_call.1} parent=1 // pred_fallthru
      _
    // Predicated region
    $region6: #{tpu_custom_call.1} parent=1 // pred_check
      _
    $region7: #{tpu_custom_call.1} parent=1 // pred_check_branch
      %27 = sbr.rel (0) target = $region9
    $region8: #{tpu_custom_call.1} parent=1 // pred_region
      _
    $region9: #{tpu_custom_call.1} parent=1 // pred_fallthru
      _
    // Predicated region
    $region10: #{tpu_custom_call.1} parent=1 // pred_check
      _
    $region11: #{tpu_custom_call.1} parent=1 // pred_check_branch
      %29 = sbr.rel (0) target = $region13
    $region12: #{tpu_custom_call.1} parent=1 // pred_region
      _
    $region13: #{tpu_custom_call.1} parent=1 // pred_fallthru
      _
    // Predicated region
    $region14: #{tpu_custom_call.1} parent=1 // pred_check
      _
    $region15: #{tpu_custom_call.1} parent=1 // pred_check_branch
      %31 = sbr.rel (0) target = $region17
    $region16: #{tpu_custom_call.1} parent=1 // pred_region
      _
    $region17: #{tpu_custom_call.1} parent=1 // pred_fallthru
      _
    // Predicated region
    $region18: #{tpu_custom_call.1} parent=1 // pred_check
      _
    $region19: #{tpu_custom_call.1} parent=1 // pred_check_branch
      %33 = sbr.rel (0) target = $region21
    $region20: #{tpu_custom_call.1} parent=1 // pred_region
      _
    $region21: #{tpu_custom_call.1} parent=1 // pred_fallthru
      _
    // Predicated region
    $region22: #{tpu_custom_call.1} parent=1 // pred_check
      _
    $region23: #{tpu_custom_call.1} parent=1 // pred_check_branch
      %35 = sbr.rel (0) target = $region25
    $region24: #{tpu_custom_call.1} parent=1 // pred_region
      _
    $region25: #{tpu_custom_call.1} parent=1 // pred_fallthru
      _
    // Predicated region
    $region26: #{tpu_custom_call.1} parent=1 // pred_check
      _
    $region27: #{tpu_custom_call.1} parent=1 // pred_check_branch
      %37 = sbr.rel (0) target = $region29
    $region28: #{tpu_custom_call.1} parent=1 // pred_region
      %s39 = ssub.s32 16, 16
      %40 = vsyncadd [#allocation6], %s39
      %s42 = sshll.u32 [#allocation5], 4
      %s43 = int_to_ptr.vmem [resolvable:$true] %s42
      %45 = dma.hbm_to_vmem [thread:$0]  %s6, 16, %s43, [#allocation6]
    $region29: #{tpu_custom_call.1} parent=1 // pred_fallthru
      _
    // Predicated region
    $region30: #{tpu_custom_call.1} parent=1 // pred_check
      _
    $region31: #{tpu_custom_call.1} parent=1 // pred_check_branch
      %47 = sbr.rel (0) target = $region33
    $region32: #{tpu_custom_call.1} parent=1 // pred_region
      _
    $region33: #{tpu_custom_call.1} parent=1 // pred_fallthru
      _
    // Predicated region
    $region34: #{tpu_custom_call.1} parent=1 // pred_check
      _
    $region35: #{tpu_custom_call.1} parent=1 // pred_check_branch
      %49 = sbr.rel (0) target = $region37
    $region36: #{tpu_custom_call.1} parent=1 // pred_region
      %50 = dma.done [#allocation3], 128
    $region37: #{tpu_custom_call.1} parent=1 // pred_fallthru
      _
    // Predicated region
    $region38: #{tpu_custom_call.1} parent=1 // pred_check
      _
    $region39: #{tpu_custom_call.1} parent=1 // pred_check_branch
      %52 = sbr.rel (0) target = $region41
    $region40: #{tpu_custom_call.1} parent=1 // pred_region
      %53 = dma.done [#allocation6], 16
    $region41: #{tpu_custom_call.1} parent=1 // pred_fallthru
      _
    %v54 = vld [vmem:[#allocation2] sm:$0xff]
    %v55 = vld [vmem:[%s1] sm:$0xff]
    %v56 = vld [vmem:[%s1 + $0x8] sm:$0xff]
    %v57 = vld [vmem:[%s2] sm:$0x1]
    %v59 = vlaneseq
    %v60 = vshrl.u32 %v59, 7
    %v61 = vsub.s32 0, %v60
    %v62 = vrot.slane %v57, %v61
    %vm64 = vcmask 130048
    %v66 = vsel %vm64, %v54, 0
    %68 = vmatprep.subr.mxu0 0.0
    %69 = vmatpush1.msra.mxu0 %v55
    %70 = vmatprep.subr.mxu0 0.0
    %71 = vmatpush1.msra.mxu0 %v56
    %72 = vmatprep.subr.mxu0 0.0
    %73 = vmatpush1.msra.mxu0 0.0
    %74 = vmatprep.subr.mxu0 0.0
    %75 = vmatpush1.msra.mxu0 0.0
    %76 = vmatprep.subr.mxu0 0.0
    %77 = vmatpush1.msra.mxu0 0.0
    %78 = vmatprep.subr.mxu0 0.0
    %79 = vmatpush1.msra.mxu0 0.0
    %80 = vmatprep.subr.mxu0 0.0
    %81 = vmatpush1.msra.mxu0 0.0
    %82 = vmatprep.subr.mxu0 0.0
    %83 = vmatpush1.msra.mxu0 0.0
    %84 = vmatprep.subr.mxu0 0.0
    %85 = vmatpush1.msra.mxu0 0.0
    %86 = vmatprep.subr.mxu0 0.0
    %87 = vmatpush1.msra.mxu0 0.0
    %88 = vmatprep.subr.mxu0 0.0
    %89 = vmatpush1.msra.mxu0 0.0
    %90 = vmatprep.subr.mxu0 0.0
    %91 = vmatpush1.msra.mxu0 0.0
    %92 = vmatprep.subr.mxu0 0.0
    %93 = vmatpush1.msra.mxu0 0.0
    %94 = vmatprep.subr.mxu0 0.0
    %95 = vmatpush1.msra.mxu0 0.0
    %96 = vmatprep.subr.mxu0 0.0
    %97 = vmatpush1.msra.mxu0 0.0
    %98 = vmatprep.subr.mxu0 0.0
    %99 = vmatpush1.msra.mxu0 0.0
    %100 = vmatprep.subr.mxu0 0.0
    %101 = vmatpush1.msra.mxu0 0.0
    %102 = vmatprep.subr.mxu0 0.0
    %103 = vmatpush1.msra.mxu0 0.0
    %104 = vmatprep.subr.mxu0 0.0
    %105 = vmatpush1.msra.mxu0 0.0
    %106 = vmatprep.subr.mxu0 0.0
    %107 = vmatpush1.msra.mxu0 0.0
    %108 = vmatprep.subr.mxu0 0.0
    %109 = vmatpush1.msra.mxu0 0.0
    %110 = vmatprep.subr.mxu0 0.0
    %111 = vmatpush1.msra.mxu0 0.0
    %112 = vmatprep.subr.mxu0 0.0
    %113 = vmatpush1.msra.mxu0 0.0
    %114 = vmatprep.subr.mxu0 0.0
    %115 = vmatpush1.msra.mxu0 0.0
    %116 = vmatprep.subr.mxu0 0.0
    %117 = vmatpush1.msra.mxu0 0.0
    %118 = vmatprep.subr.mxu0 0.0
    %119 = vmatpush1.msra.mxu0 0.0
    %120 = vmatprep.subr.mxu0 0.0
    %121 = vmatpush1.msra.mxu0 0.0
    %122 = vmatprep.subr.mxu0 0.0
    %123 = vmatpush1.msra.mxu0 0.0
    %124 = vmatprep.subr.mxu0 0.0
    %125 = vmatpush1.msra.mxu0 0.0
    %126 = vmatprep.subr.mxu0 0.0
    %127 = vmatpush1.msra.mxu0 0.0
    %128 = vmatprep.subr.mxu0 0.0
    %129 = vmatpush1.msra.mxu0 0.0
    %130 = vmatprep.subr.mxu0 0.0
    %131 = vmatpush1.msra.mxu0 0.0
    %132 = vmatprep.mubr.f32.mxu0 0.0
    %133 = vmatmul.mubr.f32.gmra.mrb[0].mxu0 %v66
    %v134 = vpop.f32.mrb[0].mxu0
    %v135 = vadd.f32 %v62, %v134
    %v136 = vpop.f32.mrb[0].mxu0
    %137 = vdwg.mxu0
    %vm138 = vcmp.gt.f32.partialorder %v135, 0.0
    %v139 = vmul.f32 %v135, 0.01
    %v140 = vsel %vm138, %v135, %v139
    %v141 = vld [vmem:[%s3] sm:$0xff]
    %v142 = vld [vmem:[%s3 + $0x8] sm:$0xff]
    %v143 = vld [vmem:[%s3 + $0x10] sm:$0xff]
    %v144 = vld [vmem:[%s3 + $0x18] sm:$0xff]
    %v145 = vld [vmem:[%s3 + $0x20] sm:$0xff]
    %v146 = vld [vmem:[%s3 + $0x28] sm:$0xff]
    %v147 = vld [vmem:[%s3 + $0x30] sm:$0xff]
    %v148 = vld [vmem:[%s3 + $0x38] sm:$0xff]
    %v149 = vld [vmem:[%s4] sm:$0x1]
    %v151 = vlaneseq
    %v152 = vshrl.u32 %v151, 7
    %v153 = vsub.s32 0, %v152
    %v154 = vrot.slane %v149, %v153
    %vm156 = vcmask 523264
    %v158 = vsel %vm156, %v140, 0
    %160 = vmatprep.subr.mxu0 0.0
    %161 = vmatpush1.msra.mxu0 %v141
    %162 = vmatprep.subr.mxu0 0.0
    %163 = vmatpush1.msra.mxu0 %v142
    %164 = vmatprep.subr.mxu0 0.0
    %165 = vmatpush1.msra.mxu0 %v143
    %166 = vmatprep.subr.mxu0 0.0
    %167 = vmatpush1.msra.mxu0 %v144
    %168 = vmatprep.subr.mxu0 0.0
    %169 = vmatpush1.msra.mxu0 %v145
    %170 = vmatprep.subr.mxu0 0.0
    %171 = vmatpush1.msra.mxu0 %v146
    %172 = vmatprep.subr.mxu0 0.0
    %173 = vmatpush1.msra.mxu0 %v147
    %174 = vmatprep.subr.mxu0 0.0
    %175 = vmatpush1.msra.mxu0 %v148
    %176 = vmatprep.subr.mxu0 0.0
    %177 = vmatpush1.msra.mxu0 0.0
    %178 = vmatprep.subr.mxu0 0.0
    %179 = vmatpush1.msra.mxu0 0.0
    %180 = vmatprep.subr.mxu0 0.0
    %181 = vmatpush1.msra.mxu0 0.0
    %182 = vmatprep.subr.mxu0 0.0
    %183 = vmatpush1.msra.mxu0 0.0
    %184 = vmatprep.subr.mxu0 0.0
    %185 = vmatpush1.msra.mxu0 0.0
    %186 = vmatprep.subr.mxu0 0.0
    %187 = vmatpush1.msra.mxu0 0.0
    %188 = vmatprep.subr.mxu0 0.0
    %189 = vmatpush1.msra.mxu0 0.0
    %190 = vmatprep.subr.mxu0 0.0
    %191 = vmatpush1.msra.mxu0 0.0
    %192 = vmatprep.subr.mxu0 0.0
    %193 = vmatpush1.msra.mxu0 0.0
    %194 = vmatprep.subr.mxu0 0.0
    %195 = vmatpush1.msra.mxu0 0.0
    %196 = vmatprep.subr.mxu0 0.0
    %197 = vmatpush1.msra.mxu0 0.0
    %198 = vmatprep.subr.mxu0 0.0
    %199 = vmatpush1.msra.mxu0 0.0
    %200 = vmatprep.subr.mxu0 0.0
    %201 = vmatpush1.msra.mxu0 0.0
    %202 = vmatprep.subr.mxu0 0.0
    %203 = vmatpush1.msra.mxu0 0.0
    %204 = vmatprep.subr.mxu0 0.0
    %205 = vmatpush1.msra.mxu0 0.0
    %206 = vmatprep.subr.mxu0 0.0
    %207 = vmatpush1.msra.mxu0 0.0
    %208 = vmatprep.subr.mxu0 0.0
    %209 = vmatpush1.msra.mxu0 0.0
    %210 = vmatprep.subr.mxu0 0.0
    %211 = vmatpush1.msra.mxu0 0.0
    %212 = vmatprep.subr.mxu0 0.0
    %213 = vmatpush1.msra.mxu0 0.0
    %214 = vmatprep.subr.mxu0 0.0
    %215 = vmatpush1.msra.mxu0 0.0
    %216 = vmatprep.subr.mxu0 0.0
    %217 = vmatpush1.msra.mxu0 0.0
    %218 = vmatprep.subr.mxu0 0.0
    %219 = vmatpush1.msra.mxu0 0.0
    %220 = vmatprep.subr.mxu0 0.0
    %221 = vmatpush1.msra.mxu0 0.0
    %222 = vmatprep.subr.mxu0 0.0
    %223 = vmatpush1.msra.mxu0 0.0
    %224 = vmatprep.mubr.f32.mxu0 0.0
    %225 = vmatmul.mubr.f32.gmra.mrb[0].mxu0 %v158
    %v226 = vpop.f32.mrb[0].mxu0
    %v227 = vadd.f32 %v154, %v226
    %v228 = vpop.f32.mrb[0].mxu0
    %229 = vdwg.mxu0
    %vm230 = vcmp.gt.f32.partialorder %v227, 0.0
    %v231 = vmul.f32 %v227, 0.01
    %v232 = vsel %vm230, %v227, %v231
    %v233 = vld [vmem:[%s5] sm:$0xff]
    %v234 = vld [vmem:[%s5 + $0x8] sm:$0xff]
    %v235 = vld [vmem:[%s5 + $0x10] sm:$0xff]
    %v236 = vld [vmem:[%s5 + $0x18] sm:$0xff]
    %v237 = vld [vmem:[%s5 + $0x20] sm:$0xff]
    %v238 = vld [vmem:[%s5 + $0x28] sm:$0xff]
    %v239 = vld [vmem:[%s5 + $0x30] sm:$0xff]
    %v240 = vld [vmem:[%s5 + $0x38] sm:$0xff]
    %v241 = vld [vmem:[#allocation5] sm:$0x1]
    %v243 = vlaneseq
    %v244 = vshrl.u32 %v243, 7
    %v245 = vsub.s32 0, %v244
    %v246 = vrot.slane %v241, %v245
    %v249 = vsel %vm156, %v232, 0
    %251 = vmatprep.subr.mxu0 0.0
    %252 = vmatpush1.msra.mxu0 %v233
    %253 = vmatprep.subr.mxu0 0.0
    %254 = vmatpush1.msra.mxu0 %v234
    %255 = vmatprep.subr.mxu0 0.0
    %256 = vmatpush1.msra.mxu0 %v235
    %257 = vmatprep.subr.mxu0 0.0
    %258 = vmatpush1.msra.mxu0 %v236
    %259 = vmatprep.subr.mxu0 0.0
    %260 = vmatpush1.msra.mxu0 %v237
    %261 = vmatprep.subr.mxu0 0.0
    %262 = vmatpush1.msra.mxu0 %v238
    %263 = vmatprep.subr.mxu0 0.0
    %264 = vmatpush1.msra.mxu0 %v239
    %265 = vmatprep.subr.mxu0 0.0
    %266 = vmatpush1.msra.mxu0 %v240
    %267 = vmatprep.subr.mxu0 0.0
    %268 = vmatpush1.msra.mxu0 0.0
    %269 = vmatprep.subr.mxu0 0.0
    %270 = vmatpush1.msra.mxu0 0.0
    %271 = vmatprep.subr.mxu0 0.0
    %272 = vmatpush1.msra.mxu0 0.0
    %273 = vmatprep.subr.mxu0 0.0
    %274 = vmatpush1.msra.mxu0 0.0
    %275 = vmatprep.subr.mxu0 0.0
    %276 = vmatpush1.msra.mxu0 0.0
    %277 = vmatprep.subr.mxu0 0.0
    %278 = vmatpush1.msra.mxu0 0.0
    %279 = vmatprep.subr.mxu0 0.0
    %280 = vmatpush1.msra.mxu0 0.0
    %281 = vmatprep.subr.mxu0 0.0
    %282 = vmatpush1.msra.mxu0 0.0
    %283 = vmatprep.subr.mxu0 0.0
    %284 = vmatpush1.msra.mxu0 0.0
    %285 = vmatprep.subr.mxu0 0.0
    %286 = vmatpush1.msra.mxu0 0.0
    %287 = vmatprep.subr.mxu0 0.0
    %288 = vmatpush1.msra.mxu0 0.0
    %289 = vmatprep.subr.mxu0 0.0
    %290 = vmatpush1.msra.mxu0 0.0
    %291 = vmatprep.subr.mxu0 0.0
    %292 = vmatpush1.msra.mxu0 0.0
    %293 = vmatprep.subr.mxu0 0.0
    %294 = vmatpush1.msra.mxu0 0.0
    %295 = vmatprep.subr.mxu0 0.0
    %296 = vmatpush1.msra.mxu0 0.0
    %297 = vmatprep.subr.mxu0 0.0
    %298 = vmatpush1.msra.mxu0 0.0
    %299 = vmatprep.subr.mxu0 0.0
    %300 = vmatpush1.msra.mxu0 0.0
    %301 = vmatprep.subr.mxu0 0.0
    %302 = vmatpush1.msra.mxu0 0.0
    %303 = vmatprep.subr.mxu0 0.0
    %304 = vmatpush1.msra.mxu0 0.0
    %305 = vmatprep.subr.mxu0 0.0
    %306 = vmatpush1.msra.mxu0 0.0
    %307 = vmatprep.subr.mxu0 0.0
    %308 = vmatpush1.msra.mxu0 0.0
    %309 = vmatprep.subr.mxu0 0.0
    %310 = vmatpush1.msra.mxu0 0.0
    %311 = vmatprep.subr.mxu0 0.0
    %312 = vmatpush1.msra.mxu0 0.0
    %313 = vmatprep.subr.mxu0 0.0
    %314 = vmatpush1.msra.mxu0 0.0
    %315 = vmatprep.mubr.f32.mxu0 0.0
    %316 = vmatmul.mubr.f32.gmra.mrb[0].mxu0 %v249
    %v317 = vpop.f32.mrb[0].mxu0
    %v318 = vadd.f32 %v246, %v317
    %v319 = vpop.f32.mrb[0].mxu0
    %320 = vdwg.mxu0
    %v321 = vld [vmem:[%s7] sm:$0xff]
    %v322 = vmax.f32 %v321, 1e-07
    %v323 = vmin.f32 %v322, 0.9999999
    %v324 = vlog2.pop %v323
    %v325 = vmul.f32 %v324, 0.6931472
    %v326 = vsub.f32 0.0, %v325
    %v327 = vlog2.pop %v326
    %v328 = vmul.f32 %v327, 0.6931472
    %v329 = vsub.f32 %v318, %v328
    %vm330 = vcmask 64512
    %v331 = vsel %vm330, %v329, -inf
    %332 = vmax.xlane.f32.xlu0 %v331
    %v333 = vpop.xlane.xlu0 %332
    %v334 = vsub.f32 %v329, %v333
    %v335 = vmul.f32 %v334, 1.442695
    %v336 = vpow.pop %v335
    %v337 = vsel %vm330, %v336, 0.0
    %338 = vadd.xlane.f32.xlu0 %v337
    %v339 = vpop.xlane.xlu0 %338
    %v340 = vrcp.pop %v339
    %v341 = vmul.f32 %v336, %v340
    %342 = vst.msk [vmem:[#allocation7] sm:$0xff] %vm330, %v341
    // Predicated region
    $region42: #{tpu_custom_call.1} parent=1 // pred_check
      _
    $region43: #{tpu_custom_call.1} parent=1 // pred_check_branch
      %344 = sbr.rel (0) target = $region45
    $region44: #{tpu_custom_call.1} parent=1 // pred_region
      %s346 = ssub.s32 128, 128
      %347 = vsyncadd [#allocation4], %s346
      %s349 = sshll.u32 [#allocation7], 4
      %s350 = int_to_ptr.vmem [resolvable:$true] %s349
      %352 = dma.vmem_to_hbm [thread:$0]  %s350, 128, %s8, [#allocation4]
    $region45: #{tpu_custom_call.1} parent=1 // pred_fallthru
      _
    // Predicated region
    $region46: #{tpu_custom_call.1} parent=1 // pred_check
      _
    $region47: #{tpu_custom_call.1} parent=1 // pred_check_branch
      %354 = sbr.rel (0) target = $region49
    $region48: #{tpu_custom_call.1} parent=1 // pred_region
      %355 = dma.done [#allocation4], 128
    $region49: #{tpu_custom_call.1} parent=1 // pred_fallthru
      _
    %356 = vsyncpa [#allocation3], 1
    %357 = vsyncpa [#allocation6], 1
    %358 = vsyncpa [#allocation4], 1

</llo_original>
